<compile_context>
chip_gen: v7x
topology: tpu7x:2x2x1
jax: 0.10.0
libtpu: 0.0.40
codegen_flags: <defaults>
</compile_context>

<pallas_src>
import functools

import jax
import jax.numpy as jnp
from jax.experimental import pallas as pl
from jax.experimental.pallas import tpu as pltpu


def _round_up(a, b):
    return (a + b - 1) // b * b


def _embed_kernel(p_ref, w_ref, shift_ref, o_ref):
    # (tile_m, Kp) bf16 @ (Kp, Ep) bf16 on the MXU, f32 accumulation, then a
    # per-output-channel shift (conv bias + BN, scale pre-folded into W).
    acc = jnp.dot(p_ref[...], w_ref[...], preferred_element_type=jnp.float32)
    o_ref[...] = (acc + shift_ref[...]).astype(o_ref.dtype)


@functools.partial(
    jax.jit,
    static_argnames=("patch_size", "stride", "padding", "eps", "tile_m"))
def embedding_forward(x, conv_w, conv_b, bn_gamma, bn_beta, bn_mean, bn_var,
                      *, patch_size, stride, padding, eps=1e-5, tile_m=512):
    """x: (N, C, H, W).  Returns (N, E, H_out, W_out) in x.dtype."""
    N, C, H, W = x.shape
    E = conv_w.shape[0]
    ph = pw = patch_size
    assert stride == patch_size, "non-overlapping patches (stride == patch_size)"
    if padding:
        x = jnp.pad(x, ((0, 0), (0, 0), (padding, padding), (padding, padding)))
        H += 2 * padding
        W += 2 * padding
    Hp, Wp = H // ph, W // pw

    # im2col: (N,C,Hp,ph,Wp,pw) -> (N,Hp,Wp,C,ph,pw) -> (M, K).
    # Stays inside this jit, so XLA fuses it with the kernel's input DMA path.
    patches = x.reshape(N, C, Hp, ph, Wp, pw).transpose(0, 2, 4, 1, 3, 5)
    patches = patches.reshape(N * Hp * Wp, C * ph * pw)
    M, K = patches.shape

    # Fold conv bias + inference-mode BatchNorm into per-channel scale/shift,
    # then fold the scale into the weight matrix (one-time O(K*E) cost).
    inv_std = jax.lax.rsqrt(bn_var.astype(jnp.float32) + eps)
    scale = bn_gamma.astype(jnp.float32) * inv_std                         # (E,)
    shift = ((conv_b.astype(jnp.float32) - bn_mean.astype(jnp.float32)) * scale
             + bn_beta.astype(jnp.float32))                                # (E,)
    # PyTorch conv weight (E, C, ph, pw) -> (K, E); K ordering matches im2col.
    w2d = conv_w.reshape(E, K).T.astype(jnp.float32) * scale[None, :]      # (K, E)

    # Lane/sublane-friendly padding: K, E -> multiples of 128; M -> tile_m.
    Kp = _round_up(K, 128)
    Ep = _round_up(E, 128)
    tile_m = max(8, min(tile_m, _round_up(pl.cdiv(M, 2), 8)))  # grid >= 2 when possible
    Mp = _round_up(M, tile_m)
    grid = (Mp // tile_m,)

    patches_p = jnp.pad(patches.astype(jnp.bfloat16), ((0, Mp - M), (0, Kp - K)))
    w_p = jnp.pad(w2d.astype(jnp.bfloat16), ((0, Kp - K), (0, Ep - E)))
    shift_p = jnp.pad(shift[None, :], ((0, 0), (0, Ep - E)))

    out_itemsize = jnp.dtype(x.dtype).itemsize
    # Double-buffered in/out tiles + (conservatively doubled) resident weight.
    vmem_bytes = (2 * tile_m * Kp * 2
                  + 2 * tile_m * Ep * out_itemsize
                  + 2 * Kp * Ep * 2
                  + 2 * Ep * 4
                  + (1 << 20))
    vmem_bytes = int(min(vmem_bytes, 32 << 20))

    cost = pl.CostEstimate(
        flops=2 * Mp * Kp * Ep,
        transcendentals=0,
        bytes_accessed=Mp * Kp * 2 + Kp * Ep * 2 + Mp * Ep * out_itemsize)

    out_p = pl.pallas_call(
        _embed_kernel,
        out_shape=jax.ShapeDtypeStruct((Mp, Ep), x.dtype),
        grid_spec=pltpu.PrefetchScalarGridSpec(
            num_scalar_prefetch=0,
            grid=grid,
            in_specs=[
                pl.BlockSpec((tile_m, Kp), lambda i: (i, 0)),  # streamed patch tile
                pl.BlockSpec((Kp, Ep), lambda i: (0, 0)),      # resident (scaled) weight
                pl.BlockSpec((1, Ep), lambda i: (0, 0)),       # resident shift
            ],
            out_specs=pl.BlockSpec((tile_m, Ep), lambda i: (i, 0)),
        ),
        compiler_params=pltpu.CompilerParams(
            dimension_semantics=("parallel",),
            vmem_limit_bytes=vmem_bytes),
        cost_estimate=cost,
    )(patches_p, w_p, shift_p)

    # Strip padding, then (M, E) -> (N, Hp, Wp, E) -> NCHW (N, E, Hp, Wp).
    out = out_p[:M, :E]
    return out.reshape(N, Hp, Wp, E).transpose(0, 3, 1, 2)


def _reference(x, conv_w, conv_b, bn_gamma, bn_beta, bn_mean, bn_var,
               *, patch_size, padding, eps=1e-5):
    if padding:
        x = jnp.pad(x, ((0, 0), (0, 0), (padding, padding), (padding, padding)))
    y = jax.lax.conv_general_dilated(
        x, conv_w, window_strides=(patch_size, patch_size), padding="VALID",
        dimension_numbers=("NCHW", "OIHW", "NCHW"))
    y = y + conv_b[None, :, None, None]
    inv_std = 1.0 / jnp.sqrt(bn_var + eps)
    return ((y - bn_mean[None, :, None, None]) * (bn_gamma * inv_std)[None, :, None, None]
            + bn_beta[None, :, None, None])


if __name__ == "__main__":
    # Small shapes consistent with the module: N=2, C=3, H=W=16, patch=4, E=64
    N, C, H, W = 2, 3, 16, 16
    patch_size, stride, padding = 4, 4, 0
    E = 64

    key = jax.random.PRNGKey(0)
    k0, k1, k2, k3, k4, k5, k6 = jax.random.split(key, 7)

    x = jax.random.normal(k0, (N, C, H, W), dtype=jnp.float32)
    conv_w = 0.02 * jax.random.normal(k1, (E, C, patch_size, patch_size), dtype=jnp.float32)
    conv_b = 0.01 * jax.random.normal(k2, (E,), dtype=jnp.float32)
    bn_gamma = 1.0 + 0.1 * jax.random.normal(k3, (E,), dtype=jnp.float32)
    bn_beta = 0.1 * jax.random.normal(k4, (E,), dtype=jnp.float32)
    bn_mean = 0.05 * jax.random.normal(k5, (E,), dtype=jnp.float32)
    bn_var = jnp.abs(jax.random.normal(k6, (E,), dtype=jnp.float32)) + 0.5

    out = embedding_forward(x, conv_w, conv_b, bn_gamma, bn_beta, bn_mean, bn_var,
                            patch_size=patch_size, stride=stride, padding=padding)
    out = jax.block_until_ready(out)

    ref = _reference(x, conv_w, conv_b, bn_gamma, bn_beta, bn_mean, bn_var,
                     patch_size=patch_size, padding=padding)
    assert out.shape == (N, E, H // patch_size, W // patch_size), out.shape
    # bf16 MXU inputs (f32 accumulation) -> slightly looser tolerance than pure f32.
    assert jnp.allclose(out, ref, atol=2e-2, rtol=2e-2), float(jnp.max(jnp.abs(out - ref)))

    print("KERNEL_OK")
</pallas_src>

<mosaic_0001>
module attributes {stable_mosaic.version = 11 : i64} {
  func.func @_embed_kernel(%arg0: i32, %arg1: memref<16x128xbf16, #tpu.memory_space<vmem>>, %arg2: memref<128x128xbf16, #tpu.memory_space<vmem>>, %arg3: memref<1x128xf32, #tpu.memory_space<vmem>>, %arg4: memref<16x128xf32, #tpu.memory_space<vmem>>) attributes {dimension_semantics = [#tpu.dimension_semantics<parallel>], iteration_bounds = array<i64: 2>, scalar_prefetch = 0 : i64, scratch_operands = 0 : i64, tpu.core_type = #tpu.core_type<tc>, window_params = [{transform_indices = @transform_0, window_bounds = array<i64: 16, 128>}, {pipeline_mode = #tpu.pipeline_mode<synchronous>, transform_indices = @transform_1, window_bounds = array<i64: 128, 128>}, {pipeline_mode = #tpu.pipeline_mode<synchronous>, transform_indices = @transform_2, window_bounds = array<i64: 1, 128>}, {transform_indices = @transform_3, window_bounds = array<i64: 16, 128>}]} {
    %c0 = arith.constant 0 : index
    %c0_0 = arith.constant 0 : index
    %0 = vector.load %arg1[%c0, %c0_0] : memref<16x128xbf16, #tpu.memory_space<vmem>>, vector<16x128xbf16>
    %c0_1 = arith.constant 0 : index
    %c0_2 = arith.constant 0 : index
    %1 = vector.load %arg2[%c0_1, %c0_2] : memref<128x128xbf16, #tpu.memory_space<vmem>>, vector<128x128xbf16>
    %cst = arith.constant dense<0.000000e+00> : vector<16x128xf32>
    %2 = tpu.matmul %0, %1, %cst {dimension_numbers = #tpu.dot_dimension_numbers<[1], [0], [0], [1], [0, 0, 1, 1], [], []>} : vector<16x128xbf16>, vector<128x128xbf16>, vector<16x128xf32> -> vector<16x128xf32>
    %c0_3 = arith.constant 0 : index
    %c0_4 = arith.constant 0 : index
    %3 = vector.load %arg3[%c0_3, %c0_4] : memref<1x128xf32, #tpu.memory_space<vmem>>, vector<1x128xf32>
    %4 = vector.broadcast %3 : vector<1x128xf32> to vector<16x128xf32>
    %5 = arith.addf %2, %4 : vector<16x128xf32>
    %c0_5 = arith.constant 0 : index
    %c0_6 = arith.constant 0 : index
    %6 = vector.load %arg4[%c0_5, %c0_6] : memref<16x128xf32, #tpu.memory_space<vmem>>, vector<16x128xf32>
    tpu.vector_store %arg4[%c0_5, %c0_6], %5 {strides = array<i32>} : memref<16x128xf32, #tpu.memory_space<vmem>>, vector<16x128xf32>,
    return
  }
  func.func @transform_0(%arg0: i32) -> (i32, i32) {
    %c0_i32 = arith.constant 0 : i32
    %c0_i32_0 = arith.constant 0 : i32
    return %arg0, %c0_i32 : i32, i32
  }
  func.func @transform_1(%arg0: i32) -> (i32, i32) {
    %c0_i32 = arith.constant 0 : i32
    %c0_i32_0 = arith.constant 0 : i32
    %c0_i32_1 = arith.constant 0 : i32
    return %c0_i32, %c0_i32_0 : i32, i32
  }
  func.func @transform_2(%arg0: i32) -> (i32, i32) {
    %c0_i32 = arith.constant 0 : i32
    %c0_i32_0 = arith.constant 0 : i32
    %c0_i32_1 = arith.constant 0 : i32
    return %c0_i32, %c0_i32_0 : i32, i32
  }
  func.func @transform_3(%arg0: i32) -> (i32, i32) {
    %c0_i32 = arith.constant 0 : i32
    %c0_i32_0 = arith.constant 0 : i32
    return %arg0, %c0_i32 : i32, i32
  }
}

</mosaic_0001>

<llo_original>
// kernel: embedding_forward.1
$region0: #{embedding_forward.1}
  #allocation0 [shape = 'u32[]', space=smem, size = 0x4, offset = 0x4, fixed_abs, tag = 'smem constant byte address 0x4 - core index']
  #allocation1 [shape = 'u32[144,128]{1,0:T(1,128)}', space=vmem, size = 0x12000, scoped, tag = 'internal scratch']
  %s0 = inlined_call_operand.vmem [shape: bf16[32,128], index: 0, kind: input, shape index: {}]
  %s1 = inlined_call_operand.vmem [shape: bf16[128,128], index: 1, kind: input, shape index: {}]
  %s2 = inlined_call_operand.vmem [shape: f32[1,128], index: 2, kind: input, shape index: {}]
  %s3 = inlined_call_operand.hbm [shape: f32[32,128], index: 3, kind: output, shape index: {}]
  %s4 = sld [smem:[#allocation0]]
  $region45: #{embedding_forward.1} parent=0
    _
  %s6 = ssub.s32 1, %s4
  %s7 = scalar_select 0, %s6, %s4
  $region1: #{embedding_forward.1} parent=0
    #allocation2 [shape = 'u8[16384]{0}', space=vmem, size = 0x4000, scoped, tag = 'output window, operand 0']
    #allocation3 [shape = 's32[2]{0}', space=sflag, size = 0x8, scoped, tag = 'scoped memory for embedding_forward.1']
    %8 = vsyncpa [#allocation3], 0
    %s9 = scalar_lea.sflag [#allocation3], 1
    %10 = vsyncpa %s9, 0
    loop: start=0, step=1, limit=4
    $region2: #{embedding_forward.1} parent=1 // loop_pre_header
      _
    $region3: #{embedding_forward.1} parent=1 // loop_header
      %s12 = sphi 0, %s16
      %p13 = scmp.ge.s32.totalorder %s12, 4
      %s22 = sphi 0, %s24
      %s25 = sphi 0, %s22
      %s26 = sphi 0, %s25
      %s42 = sphi 0, %s26
      %s46 = sphi 0, %s46
      %s48 = sphi 0, %s46
      %s49 = sphi 0, %s48
      %s63 = sphi 0, %s49
      %s67 = sphi 0, %s67
      %s69 = sphi 0, %s67
      %s70 = sphi 0, %s69
      %s84 = sphi 0, %s70
      %s90 = sphi 0, %s92
      %s93 = sphi 0, %s90
      %s94 = sphi 0, %s93
      %s110 = sphi 0, %s94
    $region4: #{embedding_forward.1} parent=1 // loop_header_branch
      %15 = sbr.rel (%p13) target = $region8
    $region5: #{embedding_forward.1} parent=1 // loop_body
      %s17 = ssub.s32 %s12, 1
      %s18 = ssub.s32 %s12, 2
      %s19 = sadd.s32 %s12, 1
      %s20 = ssub.s32 %s12, %s19
      %p21 = scmp.eq.s32.totalorder %s20, 0
      %s23 = sadd.s32 %s22, 1
      %s24 = scalar_select %p21, %s22, %s23
      %p27 = pneg %p21
      %p28 = scmp.eq.s32.totalorder %s12, 1
      %p29 = por %p27, %p28
      %p30 = scmp.ne.s32.totalorder %s22, %s25
      %p31 = scmp.eq.s32.totalorder %s12, 0
      %p32 = por %p30, %p31
      %p33 = scmp.ne.s32.totalorder %s22, %s25
      %p34 = scmp.eq.s32.totalorder %s17, 1
      %p35 = por %p33, %p34
      %p36 = scmp.ne.s32.totalorder %s25, %s26
      %p37 = scmp.eq.s32.totalorder %s17, 0
      %p38 = por %p36, %p37
      %p39 = scmp.ne.s32.totalorder %s25, %s26
      %p40 = scmp.eq.s32.totalorder %s18, 1
      %p41 = por %p39, %p40
      %p43 = scmp.ne.s32.totalorder %s26, %s42
      %p44 = scmp.eq.s32.totalorder %s18, 0
      %p45 = por %p43, %p44
      %s47 = sadd.s32 %s46, 1
      %p50 = scmp.eq.s32.totalorder %s12, 1
      %p51 = scmp.ne.s32.totalorder %s46, %s48
      %p52 = scmp.eq.s32.totalorder %s12, 0
      %p53 = por %p51, %p52
      %p54 = scmp.ne.s32.totalorder %s46, %s48
      %p55 = scmp.eq.s32.totalorder %s17, 1
      %p56 = por %p54, %p55
      %p57 = scmp.ne.s32.totalorder %s48, %s49
      %p58 = scmp.eq.s32.totalorder %s17, 0
      %p59 = por %p57, %p58
      %p60 = scmp.ne.s32.totalorder %s48, %s49
      %p61 = scmp.eq.s32.totalorder %s18, 1
      %p62 = por %p60, %p61
      %p64 = scmp.ne.s32.totalorder %s49, %s63
      %p65 = scmp.eq.s32.totalorder %s18, 0
      %p66 = por %p64, %p65
      %s68 = sadd.s32 %s67, 1
      %p71 = scmp.eq.s32.totalorder %s12, 1
      %p72 = scmp.ne.s32.totalorder %s67, %s69
      %p73 = scmp.eq.s32.totalorder %s12, 0
      %p74 = por %p72, %p73
      %p75 = scmp.ne.s32.totalorder %s67, %s69
      %p76 = scmp.eq.s32.totalorder %s17, 1
      %p77 = por %p75, %p76
      %p78 = scmp.ne.s32.totalorder %s69, %s70
      %p79 = scmp.eq.s32.totalorder %s17, 0
      %p80 = por %p78, %p79
      %p81 = scmp.ne.s32.totalorder %s69, %s70
      %p82 = scmp.eq.s32.totalorder %s18, 1
      %p83 = por %p81, %p82
      %p85 = scmp.ne.s32.totalorder %s70, %s84
      %p86 = scmp.eq.s32.totalorder %s18, 0
      %p87 = por %p85, %p86
      %s88 = ssub.s32 %s12, %s19
      %p89 = scmp.eq.s32.totalorder %s88, 0
      %s91 = sadd.s32 %s90, 1
      %s92 = scalar_select %p89, %s90, %s91
      %p95 = pneg %p89
      %p96 = scmp.eq.s32.totalorder %s12, 1
      %p97 = por %p95, %p96
      %p98 = scmp.ne.s32.totalorder %s90, %s93
      %p99 = scmp.eq.s32.totalorder %s12, 0
      %p100 = por %p98, %p99
      %p101 = scmp.ne.s32.totalorder %s90, %s93
      %p102 = scmp.eq.s32.totalorder %s17, 1
      %p103 = por %p101, %p102
      %p104 = scmp.ne.s32.totalorder %s93, %s94
      %p105 = scmp.eq.s32.totalorder %s17, 0
      %p106 = por %p104, %p105
      %p107 = scmp.ne.s32.totalorder %s93, %s94
      %p108 = scmp.eq.s32.totalorder %s18, 1
      %p109 = por %p107, %p108
      %p111 = scmp.ne.s32.totalorder %s94, %s110
      %p112 = scmp.eq.s32.totalorder %s18, 0
      %p113 = por %p111, %p112
      %p114 = scmp.le.s32.totalorder 1, %s12
      %p115 = scmp.lt.s32.totalorder %s12, 3
      %p116 = pnand %p114, %p115
      %p117 = pneg %p116
      // Predicated region
      $region9: #{embedding_forward.1} parent=5 // pred_check
        _
      $region10: #{embedding_forward.1} parent=5 // pred_check_branch
        %119 = sbr.rel (%p116) target = $region12
      $region11: #{embedding_forward.1} parent=5 // pred_region
        %s120 = ssub.s32 %s12, 1
        // Predicated region
        $region13: #{embedding_forward.1} parent=11 // pred_check
          %p121 = pneg %p59
        $region14: #{embedding_forward.1} parent=11 // pred_check_branch
          %123 = sbr.rel (%p121) target = $region16
        $region15: #{embedding_forward.1} parent=11 // pred_region
          _
        $region16: #{embedding_forward.1} parent=11 // pred_fallthru
          _
        // Predicated region
        $region17: #{embedding_forward.1} parent=11 // pred_check
          %p124 = pneg %p80
        $region18: #{embedding_forward.1} parent=11 // pred_check_branch
          %126 = sbr.rel (%p124) target = $region20
        $region19: #{embedding_forward.1} parent=11 // pred_region
          _
        $region20: #{embedding_forward.1} parent=11 // pred_fallthru
          _
      $region12: #{embedding_forward.1} parent=5 // pred_fallthru
        _
      %p127 = scmp.lt.s32.totalorder %s12, 2
      // Predicated region
      $region21: #{embedding_forward.1} parent=5 // pred_check
        %p128 = pneg %p127
      $region22: #{embedding_forward.1} parent=5 // pred_check_branch
        %130 = sbr.rel (%p128) target = $region24
      $region23: #{embedding_forward.1} parent=5 // pred_region
        // Predicated region
        $region25: #{embedding_forward.1} parent=23 // pred_check
          %p131 = pneg %p32
        $region26: #{embedding_forward.1} parent=23 // pred_check_branch
          %133 = sbr.rel (%p131) target = $region28
        $region27: #{embedding_forward.1} parent=23 // pred_region
          %s134 = smul.u32 2, %s12
          %p135 = scmp.lt.s32.totalorder %s134, 3
          %s136 = scalar_select %p135, %s134, 3
          %s137 = smul.addr %s136, 4
          %s138 = scalar_lea.vmem %s0, %s137
          %s139 = smul.u32 2, %s12
        $region28: #{embedding_forward.1} parent=23 // pred_fallthru
          _
      $region24: #{embedding_forward.1} parent=5 // pred_fallthru
        _
      %p140 = scmp.le.s32.totalorder 1, %s12
      %p141 = scmp.lt.s32.totalorder %s12, 3
      %p142 = pnand %p140, %p141
      %p143 = pneg %p142
      // Predicated region
      $region29: #{embedding_forward.1} parent=5 // pred_check
        _
      $region30: #{embedding_forward.1} parent=5 // pred_check_branch
        %145 = sbr.rel (%p142) target = $region32
      $region31: #{embedding_forward.1} parent=5 // pred_region
        %s146 = ssub.s32 %s12, 1
        %s147 = smul.u32 2, %s17
        %p148 = scmp.lt.s32.totalorder %s147, 3
        %s149 = scalar_select %p148, %s147, 3
        %s150 = smul.addr %s149, 4
        %s151 = scalar_lea.vmem %s0, %s150
        %p152 = pneg %p38
        %p153 = pneg %p35
        %p154 = pneg %p59
        %p155 = pneg %p56
        %p156 = pneg %p80
        %p157 = pneg %p77
        %p158 = pneg %p106
        %p159 = pneg %p103
        %s160 = sand.u32 %s93, 1
        %s161 = scalar_lea.sflag [#allocation3], %s160
        %s162 = sand.u32 %s93, 1
        %s163 = smul.addr %s162, 16
        %s164 = scalar_lea.vmem [#allocation2], %s163
        %s165 = smul.u32 2, %s17
        %p166 = scmp.lt.s32.totalorder %s165, 3
        %s167 = scalar_select %p166, %s165, 3
        %s168 = smul.addr %s167, 4
        %s169 = scalar_lea.vmem %s0, %s168
        %s170 = smul.u32 2, %s17
        %s171 = smul.u32 2, %s17
        %v173 = vld [vmem:[%s169] sm:$0xf]
        %v174 = vld [vmem:[%s169 + $0x4] sm:$0xf]
        %v175 = vld [vmem:[%s1] sm:$0xf]
        %v176 = vld [vmem:[%s1 + $0x4] sm:$0xf]
        %v177 = vld [vmem:[%s1 + $0x8] sm:$0xf]
        %v178 = vld [vmem:[%s1 + $0xc] sm:$0xf]
        %v179 = vld [vmem:[%s1 + $0x10] sm:$0xf]
        %v180 = vld [vmem:[%s1 + $0x14] sm:$0xf]
        %v181 = vld [vmem:[%s1 + $0x18] sm:$0xf]
        %v182 = vld [vmem:[%s1 + $0x1c] sm:$0xf]
        %v183 = vld [vmem:[%s1 + $0x20] sm:$0xf]
        %v184 = vld [vmem:[%s1 + $0x24] sm:$0xf]
        %v185 = vld [vmem:[%s1 + $0x28] sm:$0xf]
        %v186 = vld [vmem:[%s1 + $0x2c] sm:$0xf]
        %v187 = vld [vmem:[%s1 + $0x30] sm:$0xf]
        %v188 = vld [vmem:[%s1 + $0x34] sm:$0xf]
        %v189 = vld [vmem:[%s1 + $0x38] sm:$0xf]
        %v190 = vld [vmem:[%s1 + $0x3c] sm:$0xf]
        %v191 = vld [vmem:[%s2] sm:$0x1]
        %v193 = vlaneseq
        %v194 = vshrl.u32 %v193, 7
        %v195 = vsub.s32 0, %v194
        %v196 = vrot.slane %v191, %v195
        %v200 = vunpack.c.l.b16 %v173
        %v201 = vunpack.c.l.b16 %v174
        %v202 = vpack.c.b16 %v201, %v200
        %v220 = vunpack.c.l.b16 %v175
        %v221 = vunpack.c.l.b16 %v176
        %v222 = vunpack.c.l.b16 %v177
        %v223 = vunpack.c.l.b16 %v178
        %v224 = vunpack.c.l.b16 %v179
        %v225 = vunpack.c.l.b16 %v180
        %v226 = vunpack.c.l.b16 %v181
        %v227 = vunpack.c.l.b16 %v182
        %v228 = vunpack.c.l.b16 %v183
        %v229 = vunpack.c.l.b16 %v184
        %v230 = vunpack.c.l.b16 %v185
        %v231 = vunpack.c.l.b16 %v186
        %v232 = vunpack.c.l.b16 %v187
        %v233 = vunpack.c.l.b16 %v188
        %v234 = vunpack.c.l.b16 %v189
        %v235 = vunpack.c.l.b16 %v190
        %v236 = vpack.c.b16 %v221, %v220
        %v237 = vpack.c.b16 %v223, %v222
        %v238 = vpack.c.b16 %v225, %v224
        %v239 = vpack.c.b16 %v227, %v226
        %v240 = vpack.c.b16 %v229, %v228
        %v241 = vpack.c.b16 %v231, %v230
        %v242 = vpack.c.b16 %v233, %v232
        %v243 = vpack.c.b16 %v235, %v234
        %252 = vmatprep.subr.bf16.mxu0 0
        %253 = vmatpush1.bf16.msra.mxu0 %v236
        %254 = vmatprep.subr.bf16.mxu0 0
        %255 = vmatpush1.bf16.msra.mxu0 %v237
        %256 = vmatprep.subr.bf16.mxu0 0
        %257 = vmatpush1.bf16.msra.mxu0 %v238
        %258 = vmatprep.subr.bf16.mxu0 0
        %259 = vmatpush1.bf16.msra.mxu0 %v239
        %260 = vmatprep.subr.bf16.mxu0 0
        %261 = vmatpush1.bf16.msra.mxu0 %v240
        %262 = vmatprep.subr.bf16.mxu0 0
        %263 = vmatpush1.bf16.msra.mxu0 %v241
        %264 = vmatprep.subr.bf16.mxu0 0
        %265 = vmatpush1.bf16.msra.mxu0 %v242
        %266 = vmatprep.subr.bf16.mxu0 0
        %267 = vmatpush1.bf16.msra.mxu0 %v243
        %268 = vmatprep.subr.bf16.mxu0 0
        %269 = vmatpush1.bf16.msra.mxu0 0
        %270 = vmatprep.subr.bf16.mxu0 0
        %271 = vmatpush1.bf16.msra.mxu0 0
        %272 = vmatprep.subr.bf16.mxu0 0
        %273 = vmatpush1.bf16.msra.mxu0 0
        %274 = vmatprep.subr.bf16.mxu0 0
        %275 = vmatpush1.bf16.msra.mxu0 0
        %276 = vmatprep.subr.bf16.mxu0 0
        %277 = vmatpush1.bf16.msra.mxu0 0
        %278 = vmatprep.subr.bf16.mxu0 0
        %279 = vmatpush1.bf16.msra.mxu0 0
        %280 = vmatprep.subr.bf16.mxu0 0
        %281 = vmatpush1.bf16.msra.mxu0 0
        %282 = vmatprep.subr.bf16.mxu0 0
        %283 = vmatpush1.bf16.msra.mxu0 0
        %284 = vmatprep.mubr.bf16.mxu0 0
        %285 = vmatmul.mubr.bf16.gmra.mrb[0].mxu0 %v202
        %v286 = vpop.f32.mrb[0].mxu0
        %v287 = vadd.f32 %v196, %v286
        %v288 = vpop.f32.mrb[0].mxu0
        %v289 = vpop.f32.mrb[0].mxu0
        %v290 = vadd.f32 %v196, %v289
        %v291 = vpop.f32.mrb[0].mxu0
        %292 = vdwg.mxu0
        %293 = vst [vmem:[%s164] sm:$0xff] %v287
        %294 = vst [vmem:[%s164 + $0x8] sm:$0xff] %v290
        %s295 = sand.u32 %s93, 1
        %s296 = scalar_lea.sflag [#allocation3], %s295
        %s297 = sand.u32 %s93, 1
        %s298 = smul.addr %s297, 16
        %s299 = scalar_lea.vmem [#allocation2], %s298
        // Predicated region
        $region33: #{embedding_forward.1} parent=31 // pred_check
          %p300 = pneg %p103
        $region34: #{embedding_forward.1} parent=31 // pred_check_branch
          %302 = sbr.rel (%p300) target = $region36
        $region35: #{embedding_forward.1} parent=31 // pred_region
          %s303 = smul.u32 2, %s17
          %s305 = ssub.s32 256, 256
          %306 = vsyncadd %s296, %s305
          %s307 = smul.addr %s303, 128
          %s308 = scalar_lea.hbm %s3, %s307
          %s309 = sshll.u32 %s299, 4
          %s310 = int_to_ptr.vmem [resolvable:$true] %s309
          %315 = dma.vmem_to_hbm [thread:$0]  %s310, 256, %s308, %s296, 128, 128, 8
        $region36: #{embedding_forward.1} parent=31 // pred_fallthru
          _
      $region32: #{embedding_forward.1} parent=5 // pred_fallthru
        _
      %p316 = scmp.le.s32.totalorder 2, %s12
      // Predicated region
      $region37: #{embedding_forward.1} parent=5 // pred_check
        %p317 = pneg %p316
      $region38: #{embedding_forward.1} parent=5 // pred_check_branch
        %319 = sbr.rel (%p317) target = $region40
      $region39: #{embedding_forward.1} parent=5 // pred_region
        %s320 = ssub.s32 %s12, 2
        // Predicated region
        $region41: #{embedding_forward.1} parent=39 // pred_check
          %p321 = pneg %p109
        $region42: #{embedding_forward.1} parent=39 // pred_check_branch
          %323 = sbr.rel (%p321) target = $region44
        $region43: #{embedding_forward.1} parent=39 // pred_region
          %s324 = sand.u32 %s94, 1
          %s325 = scalar_lea.sflag [#allocation3], %s324
          %s326 = sand.u32 %s94, 1
          %s327 = smul.addr %s326, 16
          %s328 = scalar_lea.vmem [#allocation2], %s327
          %329 = dma.done %s325, 256
        $region44: #{embedding_forward.1} parent=39 // pred_fallthru
          _
      $region40: #{embedding_forward.1} parent=5 // pred_fallthru
        _
    $region6: #{embedding_forward.1} parent=1 // loop_footer
      %s16 = sadd.s32 1, %s12
    $region7: #{embedding_forward.1} parent=1 // loop_footer_branch
      %11 = sbr.rel target = $region3
    $region8: #{embedding_forward.1} parent=1 // loop_exit
      _
    %330 = vsyncpa [#allocation3], 1
    %s331 = scalar_lea.sflag [#allocation3], 1
    %332 = vsyncpa %s331, 1

</llo_original>
